<compile_context>
chip_gen: v6e
topology: v6e:2x2x1
jax: 0.10.0
libtpu: 0.0.40
codegen_flags: <defaults>
</compile_context>

<pallas_src>
import functools

import jax
import jax.numpy as jnp
from jax.experimental import pallas as pl
from jax.experimental.pallas import tpu as pltpu


def _round_up(x, m):
    return ((x + m - 1) // m) * m


def _abs_linear_kernel_nct(x_ref, w_ref, b_ref, o_ref, *, compute_dtype):
    # x_ref: (1, in_dim, tt)   w_ref: (out_dim, in_dim)   b_ref: (out_dim, 1)
    # o_ref: (1, out_dim, tt)  -- lane-dense along T.
    x = x_ref[0]                                              # (in_dim, tt)
    if compute_dtype is not None:
        x = x.astype(compute_dtype)                           # VPU cast, no HBM pass
    y = jnp.dot(w_ref[...], x, preferred_element_type=jnp.float32)  # (out_dim, tt)
    y = y + b_ref[...]                                        # f32 bias add
    o_ref[0] = jnp.abs(y).astype(o_ref.dtype)


def _abs_linear_kernel_ntc(x_ref, w_ref, b_ref, o_ref, *, compute_dtype):
    # x_ref: (1, in_dim, tt)   w_ref: (out_dim, in_dim)   b_ref: (1, out_dim)
    # o_ref: (1, tt, out_dim)  -- lane-dense along out_dim (>= 128).
    x = x_ref[0]                                              # (in_dim, tt)
    if compute_dtype is not None:
        x = x.astype(compute_dtype)
    # Contract in_dim directly: (tt, out_dim) = x^T @ W^T without materialising
    # transposes in VMEM.
    y = jax.lax.dot_general(x, w_ref[...], (((0,), (1,)), ((), ())),
                            preferred_element_type=jnp.float32)  # (tt, out_dim)
    y = y + b_ref[...]
    o_ref[0] = jnp.abs(y).astype(o_ref.dtype)


def abs_linear_output(x, weight, bias, *, tt=1024, compute_dtype=None):
    """x: (B, in_dim, T); weight: (out_dim, in_dim); bias: (out_dim,).

    Returns (B, T, out_dim) = |x.transpose(1, 2) @ weight.T + bias|.

    tt: target T-tile width (rounded up to a multiple of 128 when T is tiled).
    compute_dtype: e.g. jnp.bfloat16 -> bf16 MXU operands (W cast once outside,
    x tile cast in-kernel); accumulation / bias / abs stay f32.
    """
    B, in_dim, T = x.shape
    out_dim = weight.shape[0]
    out_dtype = x.dtype

    if compute_dtype is not None:
        # Cast W once (amortised across the whole grid).  x is NOT cast here:
        # a wrapper-side cast is an extra HBM read+write of x.
        weight = weight.astype(compute_dtype)

    # ---- T tiling ----------------------------------------------------------
    # Block last dim must be a multiple of 128 unless it equals the full T.
    tt = max(128, _round_up(int(tt), 128))
    if T <= tt:
        tt_eff = T
        if B == 1 and T > 256:
            # v7x megacore: keep >= 2 grid programs so both TensorCores work.
            tt_eff = _round_up(pl.cdiv(T, 2), 128)
    else:
        tt_eff = tt
    num_t = pl.cdiv(T, tt_eff)          # ragged last block is masked by Pallas
    grid = (B, num_t)

    # ---- output layout choice ----------------------------------------------
    # out_dim >= 128: write (B, T, out_dim) directly (lane-dense along out_dim)
    # and skip the post-kernel transpose.  Otherwise keep lane-dense NCT tiles.
    ntc_out = out_dim >= 128

    # ---- constant-operand buffering & VMEM budget ---------------------------
    w_item = jnp.dtype(weight.dtype).itemsize
    w_bytes = out_dim * in_dim * w_item
    single_buffer_w = w_bytes >= (2 << 20)      # only worth it for big weights
    w_buffers = 1 if single_buffer_w else 2

    x_item = jnp.dtype(x.dtype).itemsize
    o_item = jnp.dtype(out_dtype).itemsize
    vmem_est = (2 * in_dim * tt_eff * x_item        # double-buffered x tiles
                + 2 * out_dim * tt_eff * o_item     # double-buffered out tiles
                + w_buffers * w_bytes               # weight (1 or 2 buffers)
                + 2 * out_dim * 4                   # bias
                + out_dim * tt_eff * 4              # f32 intermediate
                + (1 << 20))                        # misc headroom
    try:
        vmem_cap = int(pltpu.get_tpu_info().vmem_capacity_bytes)
    except Exception:                               # fall back conservatively
        vmem_cap = 64 * 1024 * 1024                 # v7x physical VMEM
    vmem_ceiling = vmem_cap * 7 // 8                # ~56 MiB v7x, ~112 MiB v5e/v6e
    vmem_limit = int(min(vmem_ceiling, max(32 * 1024 * 1024, vmem_est)))
    # TODO(synk): for weights too large for whole-W-in-VMEM (esp. v7x 64 MiB),
    # add a K/out_dim-tiled reduction path with a pl.when-managed accumulator.

    w_kwargs = dict(pipeline_mode=pl.Buffered(1)) if single_buffer_w else {}
    w_spec = pl.BlockSpec((out_dim, in_dim), lambda b, t: (0, 0), **w_kwargs)

    if ntc_out:
        kernel = functools.partial(_abs_linear_kernel_ntc,
                                   compute_dtype=compute_dtype)
        bias2 = bias.astype(jnp.float32).reshape(1, out_dim)
        b_spec = pl.BlockSpec((1, out_dim), lambda b, t: (0, 0))
        out_shape = jax.ShapeDtypeStruct((B, T, out_dim), out_dtype)
        out_spec = pl.BlockSpec((1, tt_eff, out_dim), lambda b, t: (b, t, 0))
    else:
        kernel = functools.partial(_abs_linear_kernel_nct,
                                   compute_dtype=compute_dtype)
        bias2 = bias.astype(jnp.float32).reshape(out_dim, 1)
        b_spec = pl.BlockSpec((out_dim, 1), lambda b, t: (0, 0))
        out_shape = jax.ShapeDtypeStruct((B, out_dim, T), out_dtype)
        out_spec = pl.BlockSpec((1, out_dim, tt_eff), lambda b, t: (b, 0, t))

    out = pl.pallas_call(
        kernel,
        out_shape=out_shape,
        grid_spec=pltpu.PrefetchScalarGridSpec(
            num_scalar_prefetch=0,
            grid=grid,
            in_specs=[
                pl.BlockSpec((1, in_dim, tt_eff), lambda b, t: (b, 0, t)),
                w_spec,
                b_spec,
            ],
            out_specs=out_spec,
        ),
        compiler_params=pltpu.CompilerParams(
            dimension_semantics=("parallel", "parallel"),
            vmem_limit_bytes=vmem_limit,
        ),
    )(x, weight, bias2)

    if ntc_out:
        return out
    # Small-out_dim path: cheap NCT -> NTC layout glue on the (small) output.
    return jnp.transpose(out, (0, 2, 1))


def reference(x, weight, bias):
    y = jnp.einsum("bct,oc->bto", x, weight) + bias
    return jnp.abs(y)


if __name__ == "__main__":
    key = jax.random.PRNGKey(0)
    kx, kw, kb, kx2, kw2, kb2 = jax.random.split(key, 6)

    # ---- config 1: small out_dim (NCT writeout), full-T single tile --------
    B, in_dim, T, out_dim = 2, 32, 8, 16
    # PyTorch nn.Linear default init: U(-1/sqrt(in_dim), 1/sqrt(in_dim))
    bound = 1.0 / jnp.sqrt(jnp.float32(in_dim))
    weight = jax.random.uniform(kw, (out_dim, in_dim), jnp.float32, -bound, bound)
    bias = jax.random.uniform(kb, (out_dim,), jnp.float32, -bound, bound)
    x = jax.random.normal(kx, (B, in_dim, T), jnp.float32)

    out = jax.block_until_ready(abs_linear_output(x, weight, bias))
    ref = reference(x, weight, bias)
    assert out.shape == (B, T, out_dim)
    assert jnp.allclose(out, ref, atol=1e-5, rtol=1e-5)

    # ---- config 1b: ragged multi-tile T (no pad / no slice), tt=128 ---------
    T2 = 300
    x2 = jax.random.normal(kx, (B, in_dim, T2), jnp.float32)
    out2 = jax.block_until_ready(abs_linear_output(x2, weight, bias, tt=128))
    ref2 = reference(x2, weight, bias)
    assert out2.shape == (B, T2, out_dim)
    assert jnp.allclose(out2, ref2, atol=1e-5, rtol=1e-5)

    # ---- config 1c: bf16 MXU operands (in-kernel x cast), f32 epilogue ------
    out_bf16 = jax.block_until_ready(
        abs_linear_output(x2, weight, bias, tt=128, compute_dtype=jnp.bfloat16))
    assert out_bf16.shape == (B, T2, out_dim)
    assert jnp.allclose(out_bf16, ref2, atol=5e-2, rtol=5e-2)

    # ---- config 2: out_dim >= 128 -> direct NTC writeout; B==1 megacore split
    B3, in3, T3, out3 = 1, 32, 300, 128
    w3 = jax.random.uniform(kw2, (out3, in3), jnp.float32, -bound, bound)
    b3 = jax.random.uniform(kb2, (out3,), jnp.float32, -bound, bound)
    x3 = jax.random.normal(kx2, (B3, in3, T3), jnp.float32)
    out3_arr = jax.block_until_ready(abs_linear_output(x3, w3, b3))
    ref3 = reference(x3, w3, b3)
    assert out3_arr.shape == (B3, T3, out3)
    assert jnp.allclose(out3_arr, ref3, atol=1e-5, rtol=1e-5)

    print("KERNEL_OK")
</pallas_src>

<mosaic_0001>
module attributes {stable_mosaic.version = 11 : i64} {
  func.func @_abs_linear_kernel_nct(%arg0: i32, %arg1: i32, %arg2: memref<1x32x8xf32, #tpu.memory_space<vmem>>, %arg3: memref<16x32xf32, #tpu.memory_space<vmem>>, %arg4: memref<16x1xf32, #tpu.memory_space<vmem>>, %arg5: memref<1x16x8xf32, #tpu.memory_space<vmem>>) attributes {dimension_semantics = [#tpu.dimension_semantics<parallel>, #tpu.dimension_semantics<parallel>], iteration_bounds = array<i64: 2, 1>, scalar_prefetch = 0 : i64, scratch_operands = 0 : i64, tpu.core_type = #tpu.core_type<tc>, window_params = [{transform_indices = @transform_0, window_bounds = array<i64: 1, 32, 8>}, {pipeline_mode = #tpu.pipeline_mode<synchronous>, transform_indices = @transform_1, window_bounds = array<i64: 16, 32>}, {pipeline_mode = #tpu.pipeline_mode<synchronous>, transform_indices = @transform_2, window_bounds = array<i64: 16, 1>}, {transform_indices = @transform_3, window_bounds = array<i64: 1, 16, 8>}]} {
    %c0 = arith.constant 0 : index
    %c0_0 = arith.constant 0 : index
    %c0_1 = arith.constant 0 : index
    %0 = vector.load %arg2[%c0, %c0_0, %c0_1] : memref<1x32x8xf32, #tpu.memory_space<vmem>>, vector<1x32x8xf32>
    %1 = vector.shape_cast %0 : vector<1x32x8xf32> to vector<32x8xf32>
    %c0_2 = arith.constant 0 : index
    %c0_3 = arith.constant 0 : index
    %2 = vector.load %arg3[%c0_2, %c0_3] : memref<16x32xf32, #tpu.memory_space<vmem>>, vector<16x32xf32>
    %cst = arith.constant dense<0.000000e+00> : vector<16x8xf32>
    %3 = tpu.matmul %2, %1, %cst {dimension_numbers = #tpu.dot_dimension_numbers<[1], [0], [0], [1], [0, 0, 1, 1], [], []>} : vector<16x32xf32>, vector<32x8xf32>, vector<16x8xf32> -> vector<16x8xf32>
    %c0_4 = arith.constant 0 : index
    %c0_5 = arith.constant 0 : index
    %4 = vector.load %arg4[%c0_4, %c0_5] : memref<16x1xf32, #tpu.memory_space<vmem>>, vector<16x1xf32>
    %5 = vector.broadcast %4 : vector<16x1xf32> to vector<16x8xf32>
    %6 = arith.addf %3, %5 : vector<16x8xf32>
    %7 = math.absf %6 : vector<16x8xf32>
    %c0_6 = arith.constant 0 : index
    %c0_7 = arith.constant 0 : index
    %c0_8 = arith.constant 0 : index
    %8 = vector.load %arg5[%c0_6, %c0_7, %c0_8] : memref<1x16x8xf32, #tpu.memory_space<vmem>>, vector<1x16x8xf32>
    %9 = vector.shape_cast %8 : vector<1x16x8xf32> to vector<16x8xf32>
    %10 = vector.shape_cast %7 : vector<16x8xf32> to vector<1x16x8xf32>
    tpu.vector_store %arg5[%c0_6, %c0_7, %c0_8], %10 {strides = array<i32>} : memref<1x16x8xf32, #tpu.memory_space<vmem>>, vector<1x16x8xf32>,
    return
  }
  func.func @transform_0(%arg0: i32, %arg1: i32) -> (i32, i32, i32) {
    %c0_i32 = arith.constant 0 : i32
    %c0_i32_0 = arith.constant 0 : i32
    return %arg0, %c0_i32, %arg1 : i32, i32, i32
  }
  func.func @transform_1(%arg0: i32, %arg1: i32) -> (i32, i32) {
    %c0_i32 = arith.constant 0 : i32
    %c0_i32_0 = arith.constant 0 : i32
    %c0_i32_1 = arith.constant 0 : i32
    return %c0_i32, %c0_i32_0 : i32, i32
  }
  func.func @transform_2(%arg0: i32, %arg1: i32) -> (i32, i32) {
    %c0_i32 = arith.constant 0 : i32
    %c0_i32_0 = arith.constant 0 : i32
    %c0_i32_1 = arith.constant 0 : i32
    return %c0_i32, %c0_i32_0 : i32, i32
  }
  func.func @transform_3(%arg0: i32, %arg1: i32) -> (i32, i32, i32) {
    %c0_i32 = arith.constant 0 : i32
    %c0_i32_0 = arith.constant 0 : i32
    return %arg0, %c0_i32, %arg1 : i32, i32, i32
  }
}

</mosaic_0001>

<llo_original>
// kernel: tpu_custom_call.1
$region0: #{tpu_custom_call.1}
  #allocation0 [shape = 'u32[]', space=smem, size = 0x4, offset = 0x4, fixed_abs, tag = 'smem constant byte address 0x4 - core index']
  #allocation1 [shape = 'u32[144,128]{1,0:T(1,128)}', space=vmem, size = 0x12000, scoped, tag = 'internal scratch']
  %s0 = inlined_call_operand.vmem [shape: f32[2,32,8], index: 0, kind: input, shape index: {}]
  %s1 = inlined_call_operand.vmem [shape: f32[16,32], index: 1, kind: input, shape index: {}]
  %s2 = inlined_call_operand.vmem [shape: f32[16,1], index: 2, kind: input, shape index: {}]
  %s3 = inlined_call_operand.vmem [shape: f32[2,16,8], index: 3, kind: output, shape index: {}]
  %s4 = sld [smem:[#allocation0]]
  $region45: #{tpu_custom_call.1} parent=0
    _
  %s6 = ssub.s32 1, %s4
  %s7 = scalar_select 0, %s6, %s4
  loop: start=0, step=1, limit=4
  $region2: #{tpu_custom_call.1} parent=0 // loop_pre_header
    _
  $region3: #{tpu_custom_call.1} parent=0 // loop_header
    %s9 = sphi 0, %s13
    %p10 = scmp.ge.s32.totalorder %s9, 4
    %s16 = sphi 0, %s28
    %s17 = sphi 0, %s24
    %s18 = sphi 0, %s16
    %s19 = sphi 0, %s17
    %s20 = sphi 0, %s18
    %s21 = sphi 0, %s19
    %s33 = sphi 0, %s35
    %s36 = sphi 0, %s33
    %s37 = sphi 0, %s36
    %s53 = sphi 0, %s37
    %s57 = sphi 0, %s57
    %s59 = sphi 0, %s57
    %s60 = sphi 0, %s59
    %s74 = sphi 0, %s60
    %s78 = sphi 0, %s78
    %s80 = sphi 0, %s78
    %s81 = sphi 0, %s80
    %s95 = sphi 0, %s81
    %s103 = sphi 0, %s105
    %s106 = sphi 0, %s103
    %s107 = sphi 0, %s106
    %s123 = sphi 0, %s107
  $region4: #{tpu_custom_call.1} parent=0 // loop_header_branch
    %12 = sbr.rel (%p10) target = $region8
  $region5: #{tpu_custom_call.1} parent=0 // loop_body
    %s14 = ssub.s32 %s9, 1
    %s15 = ssub.s32 %s9, 2
    %s22 = sadd.s32 1, %s17
    %p23 = scmp.ge.s32.totalorder %s22, 1
    %s24 = scalar_select %p23, 0, %s22
    %s25 = sadd.s32 1, %s16
    %s26 = scalar_select %p23, %s25, %s16
    %p27 = scmp.ge.s32.totalorder %s26, 2
    %s28 = scalar_select %p27, 0, %s26
    %s29 = ssub.s32 %s16, %s28
    %s30 = ssub.s32 %s17, %s24
    %s31 = sor.u32 %s29, %s30
    %p32 = scmp.eq.s32.totalorder %s31, 0
    %s34 = sadd.s32 %s33, 1
    %s35 = scalar_select %p32, %s33, %s34
    %p38 = pneg %p32
    %p39 = scmp.eq.s32.totalorder %s9, 1
    %p40 = por %p38, %p39
    %p41 = scmp.ne.s32.totalorder %s33, %s36
    %p42 = scmp.eq.s32.totalorder %s9, 0
    %p43 = por %p41, %p42
    %p44 = scmp.ne.s32.totalorder %s33, %s36
    %p45 = scmp.eq.s32.totalorder %s14, 1
    %p46 = por %p44, %p45
    %p47 = scmp.ne.s32.totalorder %s36, %s37
    %p48 = scmp.eq.s32.totalorder %s14, 0
    %p49 = por %p47, %p48
    %p50 = scmp.ne.s32.totalorder %s36, %s37
    %p51 = scmp.eq.s32.totalorder %s15, 1
    %p52 = por %p50, %p51
    %p54 = scmp.ne.s32.totalorder %s37, %s53
    %p55 = scmp.eq.s32.totalorder %s15, 0
    %p56 = por %p54, %p55
    %s58 = sadd.s32 %s57, 1
    %p61 = scmp.eq.s32.totalorder %s9, 1
    %p62 = scmp.ne.s32.totalorder %s57, %s59
    %p63 = scmp.eq.s32.totalorder %s9, 0
    %p64 = por %p62, %p63
    %p65 = scmp.ne.s32.totalorder %s57, %s59
    %p66 = scmp.eq.s32.totalorder %s14, 1
    %p67 = por %p65, %p66
    %p68 = scmp.ne.s32.totalorder %s59, %s60
    %p69 = scmp.eq.s32.totalorder %s14, 0
    %p70 = por %p68, %p69
    %p71 = scmp.ne.s32.totalorder %s59, %s60
    %p72 = scmp.eq.s32.totalorder %s15, 1
    %p73 = por %p71, %p72
    %p75 = scmp.ne.s32.totalorder %s60, %s74
    %p76 = scmp.eq.s32.totalorder %s15, 0
    %p77 = por %p75, %p76
    %s79 = sadd.s32 %s78, 1
    %p82 = scmp.eq.s32.totalorder %s9, 1
    %p83 = scmp.ne.s32.totalorder %s78, %s80
    %p84 = scmp.eq.s32.totalorder %s9, 0
    %p85 = por %p83, %p84
    %p86 = scmp.ne.s32.totalorder %s78, %s80
    %p87 = scmp.eq.s32.totalorder %s14, 1
    %p88 = por %p86, %p87
    %p89 = scmp.ne.s32.totalorder %s80, %s81
    %p90 = scmp.eq.s32.totalorder %s14, 0
    %p91 = por %p89, %p90
    %p92 = scmp.ne.s32.totalorder %s80, %s81
    %p93 = scmp.eq.s32.totalorder %s15, 1
    %p94 = por %p92, %p93
    %p96 = scmp.ne.s32.totalorder %s81, %s95
    %p97 = scmp.eq.s32.totalorder %s15, 0
    %p98 = por %p96, %p97
    %s99 = ssub.s32 %s16, %s28
    %s100 = ssub.s32 %s17, %s24
    %s101 = sor.u32 %s99, %s100
    %p102 = scmp.eq.s32.totalorder %s101, 0
    %s104 = sadd.s32 %s103, 1
    %s105 = scalar_select %p102, %s103, %s104
    %p108 = pneg %p102
    %p109 = scmp.eq.s32.totalorder %s9, 1
    %p110 = por %p108, %p109
    %p111 = scmp.ne.s32.totalorder %s103, %s106
    %p112 = scmp.eq.s32.totalorder %s9, 0
    %p113 = por %p111, %p112
    %p114 = scmp.ne.s32.totalorder %s103, %s106
    %p115 = scmp.eq.s32.totalorder %s14, 1
    %p116 = por %p114, %p115
    %p117 = scmp.ne.s32.totalorder %s106, %s107
    %p118 = scmp.eq.s32.totalorder %s14, 0
    %p119 = por %p117, %p118
    %p120 = scmp.ne.s32.totalorder %s106, %s107
    %p121 = scmp.eq.s32.totalorder %s15, 1
    %p122 = por %p120, %p121
    %p124 = scmp.ne.s32.totalorder %s107, %s123
    %p125 = scmp.eq.s32.totalorder %s15, 0
    %p126 = por %p124, %p125
    %p127 = scmp.le.s32.totalorder 1, %s9
    %p128 = scmp.lt.s32.totalorder %s9, 3
    %p129 = pnand %p127, %p128
    %p130 = pneg %p129
    // Predicated region
    $region9: #{tpu_custom_call.1} parent=5 // pred_check
      _
    $region10: #{tpu_custom_call.1} parent=5 // pred_check_branch
      %132 = sbr.rel (%p129) target = $region12
    $region11: #{tpu_custom_call.1} parent=5 // pred_region
      %s133 = ssub.s32 %s9, 1
      // Predicated region
      $region13: #{tpu_custom_call.1} parent=11 // pred_check
        %p134 = pneg %p70
      $region14: #{tpu_custom_call.1} parent=11 // pred_check_branch
        %136 = sbr.rel (%p134) target = $region16
      $region15: #{tpu_custom_call.1} parent=11 // pred_region
        _
      $region16: #{tpu_custom_call.1} parent=11 // pred_fallthru
        _
      // Predicated region
      $region17: #{tpu_custom_call.1} parent=11 // pred_check
        %p137 = pneg %p91
      $region18: #{tpu_custom_call.1} parent=11 // pred_check_branch
        %139 = sbr.rel (%p137) target = $region20
      $region19: #{tpu_custom_call.1} parent=11 // pred_region
        _
      $region20: #{tpu_custom_call.1} parent=11 // pred_fallthru
        _
    $region12: #{tpu_custom_call.1} parent=5 // pred_fallthru
      _
    %p140 = scmp.lt.s32.totalorder %s9, 2
    // Predicated region
    $region21: #{tpu_custom_call.1} parent=5 // pred_check
      %p141 = pneg %p140
    $region22: #{tpu_custom_call.1} parent=5 // pred_check_branch
      %143 = sbr.rel (%p141) target = $region24
    $region23: #{tpu_custom_call.1} parent=5 // pred_region
      // Predicated region
      $region25: #{tpu_custom_call.1} parent=23 // pred_check
        %p144 = pneg %p43
      $region26: #{tpu_custom_call.1} parent=23 // pred_check_branch
        %146 = sbr.rel (%p144) target = $region28
      $region27: #{tpu_custom_call.1} parent=23 // pred_region
        %p147 = scmp.lt.s32.totalorder %s16, 1
        %s148 = scalar_select %p147, %s16, 1
        %p149 = scmp.lt.s32.totalorder %s17, 0
        %s150 = scalar_select %p149, %s17, 0
        %s151 = smul.addr %s148, 4
        %s152 = sadd.s32 %s150, %s151
        %s153 = smul.addr %s152, 8
        %s154 = scalar_lea.vmem %s0, %s153
      $region28: #{tpu_custom_call.1} parent=23 // pred_fallthru
        _
    $region24: #{tpu_custom_call.1} parent=5 // pred_fallthru
      _
    %p155 = scmp.le.s32.totalorder 1, %s9
    %p156 = scmp.lt.s32.totalorder %s9, 3
    %p157 = pnand %p155, %p156
    %p158 = pneg %p157
    // Predicated region
    $region29: #{tpu_custom_call.1} parent=5 // pred_check
      _
    $region30: #{tpu_custom_call.1} parent=5 // pred_check_branch
      %160 = sbr.rel (%p157) target = $region32
    $region31: #{tpu_custom_call.1} parent=5 // pred_region
      %s161 = ssub.s32 %s9, 1
      %p162 = scmp.lt.s32.totalorder %s18, 1
      %s163 = scalar_select %p162, %s18, 1
      %p164 = scmp.lt.s32.totalorder %s19, 0
      %s165 = scalar_select %p164, %s19, 0
      %s166 = smul.addr %s163, 4
      %s167 = sadd.s32 %s165, %s166
      %s168 = smul.addr %s167, 8
      %s169 = scalar_lea.vmem %s0, %s168
      %p170 = pneg %p49
      %p171 = pneg %p46
      %p172 = pneg %p70
      %p173 = pneg %p67
      %p174 = pneg %p91
      %p175 = pneg %p88
      %p176 = pneg %p119
      %p177 = pneg %p116
      %p178 = scmp.lt.s32.totalorder %s18, 1
      %s179 = scalar_select %p178, %s18, 1
      %p180 = scmp.lt.s32.totalorder %s19, 0
      %s181 = scalar_select %p180, %s19, 0
      %s182 = smul.addr %s179, 2
      %s183 = sadd.s32 %s181, %s182
      %s184 = smul.addr %s183, 8
      %s185 = scalar_lea.vmem %s3, %s184
      %p186 = scmp.lt.s32.totalorder %s18, 1
      %s187 = scalar_select %p186, %s18, 1
      %p188 = scmp.lt.s32.totalorder %s19, 0
      %s189 = scalar_select %p188, %s19, 0
      %s190 = smul.addr %s187, 4
      %s191 = sadd.s32 %s189, %s190
      %s192 = smul.addr %s191, 8
      %s193 = scalar_lea.vmem %s0, %s192
      %p194 = scmp.lt.s32.totalorder %s18, 1
      %s195 = scalar_select %p194, %s18, 1
      %p196 = scmp.lt.s32.totalorder %s19, 0
      %s197 = scalar_select %p196, %s19, 0
      %s198 = smul.addr %s195, 2
      %s199 = sadd.s32 %s197, %s198
      %s200 = smul.addr %s199, 8
      %s201 = scalar_lea.vmem %s3, %s200
      %v202 = vld [vmem:[%s193] sm:$0xff]
      %v203 = vld [vmem:[%s193 + $0x8] sm:$0xff]
      %v204 = vld [vmem:[%s193 + $0x10] sm:$0xff]
      %v205 = vld [vmem:[%s193 + $0x18] sm:$0xff]
      %v206 = vld [vmem:[%s1] sm:$0xff]
      %v207 = vld [vmem:[%s1 + $0x8] sm:$0xff]
      %v208 = vld [vmem:[%s2] sm:$0xff]
      %v209 = vld [vmem:[%s2 + $0x8] sm:$0xff]
      %211 = vset.pattern.permute.xlu0 0
      %212 = vperm.xlu0 %211, %v208
      %v213 = vpop.permute.xlu0 %212
      %216 = vset.pattern.permute.xlu0 0
      %217 = vperm.xlu0 %216, %v209
      %v218 = vpop.permute.xlu0 %217
      %vm220 = vcmask 261120
      %v222 = vsel %vm220, %v206, 0
      %v225 = vsel %vm220, %v207, 0
      %227 = vmatprep.subr.mxu0 0.0
      %228 = vmatpush1.msra.mxu0 0.0
      %229 = vmatprep.subr.mxu0 0.0
      %230 = vmatpush1.msra.mxu0 0.0
      %231 = vmatprep.subr.mxu0 0.0
      %232 = vmatpush1.msra.mxu0 0.0
      %233 = vmatprep.subr.mxu0 0.0
      %234 = vmatpush1.msra.mxu0 0.0
      %235 = vmatprep.subr.mxu0 0.0
      %236 = vmatpush1.msra.mxu0 0.0
      %237 = vmatprep.subr.mxu0 0.0
      %238 = vmatpush1.msra.mxu0 0.0
      %239 = vmatprep.subr.mxu0 0.0
      %240 = vmatpush1.msra.mxu0 0.0
      %241 = vmatprep.subr.mxu0 0.0
      %242 = vmatpush1.msra.mxu0 0.0
      %243 = vmatprep.subr.mxu0 0.0
      %244 = vmatpush1.msra.mxu0 0.0
      %245 = vmatprep.subr.mxu0 0.0
      %246 = vmatpush1.msra.mxu0 0.0
      %247 = vmatprep.subr.mxu0 0.0
      %248 = vmatpush1.msra.mxu0 0.0
      %249 = vmatprep.subr.mxu0 0.0
      %250 = vmatpush1.msra.mxu0 0.0
      %251 = vmatprep.subr.mxu0 0.0
      %252 = vmatpush1.msra.mxu0 %v205
      %253 = vmatprep.subr.mxu0 0.0
      %254 = vmatpush1.msra.mxu0 %v204
      %255 = vmatprep.subr.mxu0 0.0
      %256 = vmatpush1.msra.mxu0 %v203
      %257 = vmatprep.subr.mxu0 0.0
      %258 = vmatpush1.msra.mxu0 %v202
      %259 = vmatprep.subr.mxu0 0.0
      %260 = vmatpush2.msra.mxu0 0.0
      %261 = vmatprep.subr.mxu0 0.0
      %262 = vmatpush2.msra.mxu0 0.0
      %263 = vmatprep.subr.mxu0 0.0
      %264 = vmatpush2.msra.mxu0 0.0
      %265 = vmatprep.subr.mxu0 0.0
      %266 = vmatpush2.msra.mxu0 0.0
      %267 = vmatprep.subr.mxu0 0.0
      %268 = vmatpush2.msra.mxu0 0.0
      %269 = vmatprep.subr.mxu0 0.0
      %270 = vmatpush2.msra.mxu0 0.0
      %271 = vmatprep.subr.mxu0 0.0
      %272 = vmatpush2.msra.mxu0 0.0
      %273 = vmatprep.subr.mxu0 0.0
      %274 = vmatpush2.msra.mxu0 0.0
      %275 = vmatprep.subr.mxu0 0.0
      %276 = vmatpush2.msra.mxu0 0.0
      %277 = vmatprep.subr.mxu0 0.0
      %278 = vmatpush2.msra.mxu0 0.0
      %279 = vmatprep.subr.mxu0 0.0
      %280 = vmatpush2.msra.mxu0 0.0
      %281 = vmatprep.subr.mxu0 0.0
      %282 = vmatpush2.msra.mxu0 0.0
      %283 = vmatprep.subr.mxu0 0.0
      %284 = vmatpush2.msra.mxu0 0.0
      %285 = vmatprep.subr.mxu0 0.0
      %286 = vmatpush2.msra.mxu0 0.0
      %287 = vmatprep.subr.mxu0 0.0
      %288 = vmatpush2.msra.mxu0 0.0
      %289 = vmatprep.subr.mxu0 0.0
      %290 = vmatpush2.msra.mxu0 0.0
      %291 = vmatprep.mubr.f32.mxu0 0.0
      %292 = vmatmul.mubr.f32.gmra.mxu0 %v222
      %v293 = vpop.f32.mrf.mxu0
      %v294 = vadd.f32 %v213, %v293
      %v295 = vpop.f32.mrf.mxu0
      %296 = vmatprep.mubr.f32.mxu0 0.0
      %297 = vmatmul.mubr.f32.gmra.mxu0 %v225
      %v298 = vpop.f32.mrf.mxu0
      %v299 = vadd.f32 %v218, %v298
      %v300 = vpop.f32.mrf.mxu0
      %301 = vdwg.mxu0
      %v302 = vand.u32 2147483647, %v294
      %v303 = vand.u32 2147483647, %v299
      %vm304 = vcmask 64512
      %305 = vst.msk [vmem:[%s201] sm:$0xff] %vm304, %v302
      %306 = vst.msk [vmem:[%s201 + $0x8] sm:$0xff] %vm304, %v303
      %p307 = scmp.lt.s32.totalorder %s18, 1
      %s308 = scalar_select %p307, %s18, 1
      %p309 = scmp.lt.s32.totalorder %s19, 0
      %s310 = scalar_select %p309, %s19, 0
      %s311 = smul.addr %s308, 2
      %s312 = sadd.s32 %s310, %s311
      %s313 = smul.addr %s312, 8
      %s314 = scalar_lea.vmem %s3, %s313
      // Predicated region
      $region33: #{tpu_custom_call.1} parent=31 // pred_check
        %p315 = pneg %p116
      $region34: #{tpu_custom_call.1} parent=31 // pred_check_branch
        %317 = sbr.rel (%p315) target = $region36
      $region35: #{tpu_custom_call.1} parent=31 // pred_region
        _
      $region36: #{tpu_custom_call.1} parent=31 // pred_fallthru
        _
    $region32: #{tpu_custom_call.1} parent=5 // pred_fallthru
      _
    %p318 = scmp.le.s32.totalorder 2, %s9
    // Predicated region
    $region37: #{tpu_custom_call.1} parent=5 // pred_check
      %p319 = pneg %p318
    $region38: #{tpu_custom_call.1} parent=5 // pred_check_branch
      %321 = sbr.rel (%p319) target = $region40
    $region39: #{tpu_custom_call.1} parent=5 // pred_region
      %s322 = ssub.s32 %s9, 2
      // Predicated region
      $region41: #{tpu_custom_call.1} parent=39 // pred_check
        %p323 = pneg %p122
      $region42: #{tpu_custom_call.1} parent=39 // pred_check_branch
        %325 = sbr.rel (%p323) target = $region44
      $region43: #{tpu_custom_call.1} parent=39 // pred_region
        %p326 = scmp.lt.s32.totalorder %s20, 1
        %s327 = scalar_select %p326, %s20, 1
        %p328 = scmp.lt.s32.totalorder %s21, 0
        %s329 = scalar_select %p328, %s21, 0
        %s330 = smul.addr %s327, 2
        %s331 = sadd.s32 %s329, %s330
        %s332 = smul.addr %s331, 8
        %s333 = scalar_lea.vmem %s3, %s332
      $region44: #{tpu_custom_call.1} parent=39 // pred_fallthru
        _
    $region40: #{tpu_custom_call.1} parent=5 // pred_fallthru
      _
  $region6: #{tpu_custom_call.1} parent=0 // loop_footer
    %s13 = sadd.s32 1, %s9
  $region7: #{tpu_custom_call.1} parent=0 // loop_footer_branch
    %8 = sbr.rel target = $region3
  $region8: #{tpu_custom_call.1} parent=0 // loop_exit
    _

</llo_original>
